<compile_context>
chip_gen: v5e
topology: v5e:2x2
jax: 0.10.0
libtpu: 0.0.40
codegen_flags: <defaults>
</compile_context>

<pallas_src>
import functools
import math

import jax
import jax.numpy as jnp
from jax.experimental import pallas as pl
from jax.experimental.pallas import tpu as pltpu


def temporal_encoding_kernel(t_ref, w_ref, phase_ref, out_ref, *, g):
    # t_ref:     [tile_rows, g]      float32   (g timestamps packed per row)
    # w_ref:     [g, width]          float32   block-diagonal 200 * div_term
    # phase_ref: [1, width]          float32   0 (even cols) / pi/2 (odd cols)
    # out_ref:   [tile_rows, width]  out dtype
    t = t_ref[...]
    # Outer-product accumulate on the VPU.  For each output lane exactly one of the g
    # weight rows is non-zero, so this is numerically identical to one mul + one add.
    pos = t[:, 0:1] * w_ref[0:1, :] + phase_ref[...]
    for j in range(1, g):
        pos = pos + t[:, j:j + 1] * w_ref[j:j + 1, :]
    out_ref[...] = jnp.sin(pos).astype(out_ref.dtype)


def make_params(d_hid):
    """Host-side constants mirroring the nn.Module buffers (scale 200 folded in)."""
    if d_hid < 128 and 128 % d_hid == 0:
        g = 128 // d_hid              # pack g timestamps per lane-dense output row
    else:
        g = 1                          # d_hid >= 128 (or awkward width): no packing
    width = g * d_hid
    sdiv = jnp.asarray(
        [200.0 / math.pow(10000.0, 2 * (j // 2) / d_hid) for j in range(d_hid)],
        dtype=jnp.float32)
    phase = jnp.asarray(
        [0.0 if j % 2 == 0 else math.pi / 2.0 for j in range(d_hid)],
        dtype=jnp.float32)
    sdiv_t = jnp.tile(sdiv, (g,))                               # [width]
    phase_t = jnp.tile(phase, (g,)).reshape(1, width)           # [1, width]
    grp = jnp.arange(width) // d_hid                            # packed slot owning lane c
    w = jnp.where(grp[None, :] == jnp.arange(g)[:, None], sdiv_t[None, :], 0.0)
    return {
        "d_hid": d_hid, "g": g, "width": width,
        "w": w.astype(jnp.float32),          # [g, width] block-diagonal 200*div_term
        "phase_tiled": phase_t,              # [1, width]
        "sdiv": sdiv.reshape(1, d_hid),      # for the non-Pallas fallback path
        "phase": phase.reshape(1, d_hid),
    }


def _choose_tile_rows(rows, width, *, vmem_budget_bytes=8 << 20, min_grid_steps=8):
    """Packed-row tile sized from the PADDED, double-buffered VMEM footprint."""
    lanes_out = pl.cdiv(width, 128) * 128
    bytes_per_row = 4 * (128 + lanes_out)          # t block (lane-padded) + out block
    max_rows_vmem = max(8, vmem_budget_bytes // (2 * bytes_per_row))   # 2x: double buffer
    if rows <= 8:
        return rows
    # also cap so the grid has >= min_grid_steps steps (megacore / pipeline work)
    tile = min(rows, max_rows_vmem, max(8, pl.cdiv(rows, min_grid_steps)))
    return max(8, (tile // 8) * 8)                 # keep sublane dim a multiple of 8


def temporal_encoding(t, params, *, tile_rows=None, out_dtype=jnp.float32,
                      use_pallas=None):
    """t: [n] or [n, 1]  ->  [n, d_hid], matching TemporalEncoding.forward."""
    d_hid, g, width = params["d_hid"], params["g"], params["width"]
    w, phase_t = params["w"], params["phase_tiled"]
    t = jnp.asarray(t, jnp.float32).reshape(-1)
    n = t.shape[0]

    if use_pallas is None:
        # Fixed pallas_call / per-step overhead dwarfs a few KiB of elementwise work.
        use_pallas = n * d_hid >= 16 * 1024
    if not use_pallas:
        pos = t.reshape(-1, 1) * params["sdiv"] + params["phase"]
        return jnp.sin(pos).astype(out_dtype)

    rows = -(-n // g)
    n_pad = rows * g
    if n_pad != n:
        t = jnp.pad(t, (0, n_pad - n))
    t_packed = t.reshape(rows, g)

    if tile_rows is None:
        tile_rows = _choose_tile_rows(rows, width)
    tile_rows = min(tile_rows, rows)
    grid = (pl.cdiv(rows, tile_rows),)

    out_bytes = rows * width * jnp.dtype(out_dtype).itemsize
    cost = pl.CostEstimate(
        flops=2 * g * rows * width,                 # g mul-adds per packed element
        transcendentals=rows * width,               # one sin per element
        bytes_accessed=4 * (rows * g + (g + 1) * width) + out_bytes,
    )

    out_packed = pl.pallas_call(
        functools.partial(temporal_encoding_kernel, g=g),
        out_shape=jax.ShapeDtypeStruct((rows, width), out_dtype),
        grid_spec=pltpu.PrefetchScalarGridSpec(
            num_scalar_prefetch=0,
            grid=grid,
            in_specs=[
                pl.BlockSpec((tile_rows, g), lambda i: (i, 0)),   # packed timestamps
                pl.BlockSpec((g, width), lambda i: (0, 0)),       # block-diag 200*div
                pl.BlockSpec((1, width), lambda i: (0, 0)),       # even/odd phase row
            ],
            out_specs=pl.BlockSpec((tile_rows, width), lambda i: (i, 0)),
        ),
        compiler_params=pltpu.CompilerParams(
            dimension_semantics=("parallel",),      # shard row tiles across TCs on v7x
            vmem_limit_bytes=32 * 1024 * 1024,
        ),
        cost_estimate=cost,
    )(t_packed, w, phase_t)

    out = out_packed.reshape(rows * g, d_hid)       # free row-major reshape
    if n_pad != n:
        out = out[:n]
    return out


# ---------------------------------------------------------------------------
# Pure-JAX reference with exact PyTorch semantics (even cols sin, odd cols cos).
# Uses a broadcast outer product (not `@`) so the reference stays full f32 on TPU.
# ---------------------------------------------------------------------------
def temporal_encoding_ref(t, d_hid):
    div = jnp.asarray(
        [1.0 / math.pow(10000.0, 2 * (j // 2) / d_hid) for j in range(d_hid)],
        dtype=jnp.float32).reshape(1, d_hid)
    pos = (jnp.asarray(t, jnp.float32).reshape(-1, 1) * 200.0) * div
    col = jnp.arange(d_hid)
    return jnp.where((col % 2) == 0, jnp.sin(pos), jnp.cos(pos))


if __name__ == "__main__":
    key = jax.random.PRNGKey(0)

    d_hid = 32
    params = make_params(d_hid)

    # --- small shape consistent with the module: n=8 timestamps, d_hid=32 -----------
    n = 8
    key, sub = jax.random.split(key)
    t = jax.random.uniform(sub, (n, 1), dtype=jnp.float32)          # args up to ~200
    out = jax.block_until_ready(temporal_encoding(t, params, use_pallas=True))
    assert out.shape == (n, d_hid) and out.dtype == jnp.float32
    # |arg| <= ~200: a few f32 ulps of argument rounding -> up to ~1e-4 in sin/cos.
    assert jnp.allclose(out, temporal_encoding_ref(t, d_hid), atol=5e-4, rtol=1e-5)

    # Small-argument check is tight (argument rounding no longer dominates).
    t_small = t * 0.005                                             # args <= ~1
    out_s = jax.block_until_ready(temporal_encoding(t_small, params, use_pallas=True))
    assert jnp.allclose(out_s, temporal_encoding_ref(t_small, d_hid),
                        atol=1e-5, rtol=1e-5)

    # --- multi-tile path with automatic tile selection (incl. padding / remainders) --
    for n2 in (1024, 1000, 13):
        key, sub = jax.random.split(key)
        t2 = jax.random.uniform(sub, (n2,), dtype=jnp.float32)
        out2 = jax.block_until_ready(temporal_encoding(t2, params, use_pallas=True))
        assert out2.shape == (n2, d_hid)
        assert jnp.allclose(out2, temporal_encoding_ref(t2, d_hid),
                            atol=5e-4, rtol=1e-5)

    # --- explicit small tile to exercise a partial last row block -------------------
    key, sub = jax.random.split(key)
    t3 = jax.random.uniform(sub, (200,), dtype=jnp.float32)         # rows=50, tile=16
    out3 = jax.block_until_ready(
        temporal_encoding(t3, params, tile_rows=16, use_pallas=True))
    assert jnp.allclose(out3, temporal_encoding_ref(t3, d_hid), atol=5e-4, rtol=1e-5)

    # --- g=1 path (d_hid already lane-dense) -----------------------------------------
    d_hid_big = 128
    params_big = make_params(d_hid_big)
    key, sub = jax.random.split(key)
    t4 = jax.random.uniform(sub, (64,), dtype=jnp.float32)
    out4 = jax.block_until_ready(temporal_encoding(t4, params_big, use_pallas=True))
    assert out4.shape == (64, d_hid_big)
    assert jnp.allclose(out4, temporal_encoding_ref(t4, d_hid_big), atol=5e-4, rtol=1e-5)

    # --- optional bf16 output (argument + sin still f32 in-kernel) -------------------
    out_bf16 = jax.block_until_ready(
        temporal_encoding(t2, params, out_dtype=jnp.bfloat16, use_pallas=True))
    assert out_bf16.dtype == jnp.bfloat16
    assert jnp.allclose(out_bf16.astype(jnp.float32),
                        temporal_encoding_ref(t2, d_hid), atol=2e-2, rtol=0)

    print("KERNEL_OK")
</pallas_src>

<mosaic_0001>
module attributes {stable_mosaic.version = 11 : i64} {
  func.func @temporal_encoding_kernel(%arg0: i32, %arg1: memref<2x4xf32, #tpu.memory_space<vmem>>, %arg2: memref<4x128xf32, #tpu.memory_space<vmem>>, %arg3: memref<1x128xf32, #tpu.memory_space<vmem>>, %arg4: memref<2x128xf32, #tpu.memory_space<vmem>>) attributes {dimension_semantics = [#tpu.dimension_semantics<parallel>], iteration_bounds = array<i64: 1>, scalar_prefetch = 0 : i64, scratch_operands = 0 : i64, tpu.core_type = #tpu.core_type<tc>, window_params = [{transform_indices = @transform_0, window_bounds = array<i64: 2, 4>}, {pipeline_mode = #tpu.pipeline_mode<synchronous>, transform_indices = @transform_1, window_bounds = array<i64: 4, 128>}, {pipeline_mode = #tpu.pipeline_mode<synchronous>, transform_indices = @transform_2, window_bounds = array<i64: 1, 128>}, {transform_indices = @transform_3, window_bounds = array<i64: 2, 128>}]} {
    %c0 = arith.constant 0 : index
    %c0_0 = arith.constant 0 : index
    %0 = vector.load %arg1[%c0, %c0_0] : memref<2x4xf32, #tpu.memory_space<vmem>>, vector<2x4xf32>
    %1 = vector.extract_strided_slice %0 {offsets = [0, 0], sizes = [2, 1], strides = [1, 1]} : vector<2x4xf32> to vector<2x1xf32>
    %c0_1 = arith.constant 0 : index
    %c0_2 = arith.constant 0 : index
    %2 = vector.load %arg2[%c0_1, %c0_2] : memref<4x128xf32, #tpu.memory_space<vmem>>, vector<1x128xf32>
    %3 = vector.broadcast %1 : vector<2x1xf32> to vector<2x128xf32>
    %4 = vector.broadcast %2 : vector<1x128xf32> to vector<2x128xf32>
    %5 = arith.mulf %3, %4 : vector<2x128xf32>
    %c0_3 = arith.constant 0 : index
    %c0_4 = arith.constant 0 : index
    %6 = vector.load %arg3[%c0_3, %c0_4] : memref<1x128xf32, #tpu.memory_space<vmem>>, vector<1x128xf32>
    %7 = vector.broadcast %6 : vector<1x128xf32> to vector<2x128xf32>
    %8 = arith.addf %5, %7 : vector<2x128xf32>
    %9 = vector.extract_strided_slice %0 {offsets = [0, 1], sizes = [2, 1], strides = [1, 1]} : vector<2x4xf32> to vector<2x1xf32>
    %c1 = arith.constant 1 : index
    %c0_5 = arith.constant 0 : index
    %10 = vector.load %arg2[%c1, %c0_5] : memref<4x128xf32, #tpu.memory_space<vmem>>, vector<1x128xf32>
    %11 = vector.broadcast %9 : vector<2x1xf32> to vector<2x128xf32>
    %12 = vector.broadcast %10 : vector<1x128xf32> to vector<2x128xf32>
    %13 = arith.mulf %11, %12 : vector<2x128xf32>
    %14 = arith.addf %8, %13 : vector<2x128xf32>
    %15 = vector.extract_strided_slice %0 {offsets = [0, 2], sizes = [2, 1], strides = [1, 1]} : vector<2x4xf32> to vector<2x1xf32>
    %c2 = arith.constant 2 : index
    %c0_6 = arith.constant 0 : index
    %16 = vector.load %arg2[%c2, %c0_6] : memref<4x128xf32, #tpu.memory_space<vmem>>, vector<1x128xf32>
    %17 = vector.broadcast %15 : vector<2x1xf32> to vector<2x128xf32>
    %18 = vector.broadcast %16 : vector<1x128xf32> to vector<2x128xf32>
    %19 = arith.mulf %17, %18 : vector<2x128xf32>
    %20 = arith.addf %14, %19 : vector<2x128xf32>
    %21 = vector.extract_strided_slice %0 {offsets = [0, 3], sizes = [2, 1], strides = [1, 1]} : vector<2x4xf32> to vector<2x1xf32>
    %c3 = arith.constant 3 : index
    %c0_7 = arith.constant 0 : index
    %22 = vector.load %arg2[%c3, %c0_7] : memref<4x128xf32, #tpu.memory_space<vmem>>, vector<1x128xf32>
    %23 = vector.broadcast %21 : vector<2x1xf32> to vector<2x128xf32>
    %24 = vector.broadcast %22 : vector<1x128xf32> to vector<2x128xf32>
    %25 = arith.mulf %23, %24 : vector<2x128xf32>
    %26 = arith.addf %20, %25 : vector<2x128xf32>
    %27 = math.sin %26 : vector<2x128xf32>
    %c0_8 = arith.constant 0 : index
    %c0_9 = arith.constant 0 : index
    %28 = vector.load %arg4[%c0_8, %c0_9] : memref<2x128xf32, #tpu.memory_space<vmem>>, vector<2x128xf32>
    tpu.vector_store %arg4[%c0_8, %c0_9], %27 {strides = array<i32>} : memref<2x128xf32, #tpu.memory_space<vmem>>, vector<2x128xf32>,
    return
  }
  func.func @transform_0(%arg0: i32) -> (i32, i32) {
    %c0_i32 = arith.constant 0 : i32
    %c0_i32_0 = arith.constant 0 : i32
    return %arg0, %c0_i32 : i32, i32
  }
  func.func @transform_1(%arg0: i32) -> (i32, i32) {
    %c0_i32 = arith.constant 0 : i32
    %c0_i32_0 = arith.constant 0 : i32
    %c0_i32_1 = arith.constant 0 : i32
    return %c0_i32, %c0_i32_0 : i32, i32
  }
  func.func @transform_2(%arg0: i32) -> (i32, i32) {
    %c0_i32 = arith.constant 0 : i32
    %c0_i32_0 = arith.constant 0 : i32
    %c0_i32_1 = arith.constant 0 : i32
    return %c0_i32, %c0_i32_0 : i32, i32
  }
  func.func @transform_3(%arg0: i32) -> (i32, i32) {
    %c0_i32 = arith.constant 0 : i32
    %c0_i32_0 = arith.constant 0 : i32
    return %arg0, %c0_i32 : i32, i32
  }
}

</mosaic_0001>

<llo_original>
// kernel: tpu_custom_call.1
$region0: #{tpu_custom_call.1}
  #allocation0 [shape = 'u32[]', space=smem, size = 0x4, offset = 0x4, fixed_abs, tag = 'smem constant byte address 0x4 - core index']
  #allocation1 [shape = 'u32[72,128]{1,0:T(1,128)}', space=vmem, size = 0x9000, scoped, tag = 'internal scratch']
  %s0 = inlined_call_operand.hbm [shape: f32[2,4], index: 0, kind: input, shape index: {}]
  %s1 = inlined_call_operand.hbm [shape: f32[4,128], index: 1, kind: input, shape index: {}]
  %s2 = inlined_call_operand.vmem [shape: f32[1,128], index: 2, kind: input, shape index: {}]
  %s3 = inlined_call_operand.hbm [shape: f32[2,128], index: 3, kind: output, shape index: {}]
  %s4 = sld [smem:[#allocation0]]
  $region30: #{tpu_custom_call.1} parent=0
    _
  %s6 = ssub.s32 1, %s4
  %s7 = scalar_select 0, %s6, %s4
  $region1: #{tpu_custom_call.1} parent=0
    #allocation2 [shape = 'u8[1024]{0}', space=vmem, size = 0x400, scoped, tag = 'input window, operand 0, single buffered']
    #allocation3 [shape = 's32[1]{0}', space=sflag, size = 0x4, scoped, tag = 'scoped memory for tpu_custom_call.1']
    #allocation4 [shape = 's32[1]{0}', space=sflag, size = 0x4, scoped, tag = 'scoped memory for tpu_custom_call.1']
    #allocation5 [shape = 'u8[2048]{0}', space=vmem, size = 0x800, scoped, tag = 'input window, operand 1, single buffered']
    #allocation6 [shape = 's32[1]{0}', space=sflag, size = 0x4, scoped, tag = 'scoped memory for tpu_custom_call.1']
    #allocation7 [shape = 'u8[1024]{0}', space=vmem, size = 0x400, scoped, tag = 'output window, operand 0, single buffered']
    %8 = vsyncpa [#allocation3], 0
    %9 = vsyncpa [#allocation6], 0
    %10 = vsyncpa [#allocation4], 0
    // Predicated region
    $region2: #{tpu_custom_call.1} parent=1 // pred_check
      _
    $region3: #{tpu_custom_call.1} parent=1 // pred_check_branch
      %12 = sbr.rel (0) target = $region5
    $region4: #{tpu_custom_call.1} parent=1 // pred_region
      %14 = vsyncadd [#allocation3], 0
      %s16 = sshll.u32 %s0, 4
      %s17 = int_to_ptr.hbm [resolvable:$true] %s16
      %s18 = sshll.u32 [#allocation2], 4
      %s19 = int_to_ptr.vmem [resolvable:$true] %s18
      %21 = dma.hbm_to_vmem [thread:$0]  %s17, 32, %s19, [#allocation3]
    $region5: #{tpu_custom_call.1} parent=1 // pred_fallthru
      _
    // Predicated region
    $region6: #{tpu_custom_call.1} parent=1 // pred_check
      _
    $region7: #{tpu_custom_call.1} parent=1 // pred_check_branch
      %23 = sbr.rel (0) target = $region9
    $region8: #{tpu_custom_call.1} parent=1 // pred_region
      %25 = vsyncadd [#allocation6], 0
      %s27 = sshll.u32 %s1, 4
      %s28 = int_to_ptr.hbm [resolvable:$true] %s27
      %s29 = sshll.u32 [#allocation5], 4
      %s30 = int_to_ptr.vmem [resolvable:$true] %s29
      %32 = dma.hbm_to_vmem [thread:$0]  %s28, 64, %s30, [#allocation6]
    $region9: #{tpu_custom_call.1} parent=1 // pred_fallthru
      _
    // Predicated region
    $region10: #{tpu_custom_call.1} parent=1 // pred_check
      _
    $region11: #{tpu_custom_call.1} parent=1 // pred_check_branch
      %34 = sbr.rel (0) target = $region13
    $region12: #{tpu_custom_call.1} parent=1 // pred_region
      _
    $region13: #{tpu_custom_call.1} parent=1 // pred_fallthru
      _
    // Predicated region
    $region14: #{tpu_custom_call.1} parent=1 // pred_check
      _
    $region15: #{tpu_custom_call.1} parent=1 // pred_check_branch
      %36 = sbr.rel (0) target = $region17
    $region16: #{tpu_custom_call.1} parent=1 // pred_region
      %38 = dma.done [#allocation3], 32
    $region17: #{tpu_custom_call.1} parent=1 // pred_fallthru
      _
    // Predicated region
    $region18: #{tpu_custom_call.1} parent=1 // pred_check
      _
    $region19: #{tpu_custom_call.1} parent=1 // pred_check_branch
      %40 = sbr.rel (0) target = $region21
    $region20: #{tpu_custom_call.1} parent=1 // pred_region
      %42 = dma.done [#allocation6], 64
    $region21: #{tpu_custom_call.1} parent=1 // pred_fallthru
      _
    %v43 = vld [vmem:[#allocation2] sm:$0x3]
    %v44 = vld [vmem:[#allocation5] sm:$0x1]
    %46 = vset.pattern.permute.xlu0 0
    %47 = vperm.xlu0 %46, %v43
    %v48 = vpop.permute.xlu0 %47
    %v50 = vperm.slane %v44, 0
    %v51 = vmul.f32 %v48, %v50
    %v52 = vld [vmem:[%s2] sm:$0x1]
    %v54 = vperm.slane %v52, 0
    %v56 = vadd.f32 %v51, %v54
    %v57 = vld [vmem:[#allocation5 + $0x1] sm:$0x1]
    %58 = vset.pattern.permute.xlu0 1
    %59 = vperm.xlu0 %58, %v43
    %v60 = vpop.permute.xlu0 %59
    %v62 = vperm.slane %v57, 0
    %v63 = vmul.f32 %v60, %v62
    %v64 = vadd.f32 %v56, %v63
    %v65 = vld [vmem:[#allocation5 + $0x2] sm:$0x1]
    %66 = vset.pattern.permute.xlu0 2
    %67 = vperm.xlu0 %66, %v43
    %v68 = vpop.permute.xlu0 %67
    %v70 = vperm.slane %v65, 0
    %v71 = vmul.f32 %v68, %v70
    %v72 = vadd.f32 %v64, %v71
    %v73 = vld [vmem:[#allocation5 + $0x3] sm:$0x1]
    %74 = vset.pattern.permute.xlu0 3
    %75 = vperm.xlu0 %74, %v43
    %v76 = vpop.permute.xlu0 %75
    %v78 = vperm.slane %v73, 0
    %v79 = vmul.f32 %v76, %v78
    %v80 = vadd.f32 %v72, %v79
    %v81 = vand.u32 2147483647, %v80
    %vm82 = vcmp.le.f32.partialorder %v81, 0.7853982
    %vm83 = vcmp.lt.s32.totalorder %v80, 0
    %v84 = vand.u32 %v80, 2139095040
    %v85 = vshrl.u32 %v84, 23
    %v86 = vsub.s32 %v85, 127
    %v87 = vand.u32 2147483647, %v80
    %v88 = vand.u32 %v87, 8388607
    %v89 = vor.u32 %v88, 8388608
    %v90 = vsub.s32 0, %v89
    %v91 = vadd.s32 %v86, 1
    %vm92 = vcmp.gt.s32.totalorder %v91, 0
    %v93 = vsel %vm92, %v91, 0
    %v94 = vshrl.u32 %v93, 5
    %v95 = vand.u32 %v93, 31
    %v96 = vsub.s32 32, %v95
    %v97 = vshrl.u32 683565275, %v96
    %v98 = vshll.u32 683565275, %v95
    %v99 = vshrl.u32 2475754826, %v96
    %v100 = vor.u32 %v98, %v99
    %v101 = vshll.u32 2475754826, %v95
    %v102 = vshrl.u32 2131351028, %v96
    %v103 = vor.u32 %v101, %v102
    %v104 = vshll.u32 2131351028, %v95
    %v105 = vshrl.u32 2102212464, %v96
    %v106 = vor.u32 %v104, %v105
    %v107 = vshll.u32 2102212464, %v95
    %v108 = vshrl.u32 920167782, %v96
    %v109 = vor.u32 %v107, %v108
    %v110 = vshll.u32 920167782, %v95
    %v111 = vshrl.u32 1326507024, %v96
    %v112 = vor.u32 %v110, %v111
    %vm113 = vcmp.lt.s32.totalorder %v94, 1
    %vm114 = vcmp.lt.s32.totalorder %v94, 2
    %vm115 = vcmp.lt.s32.totalorder %v94, 3
    %vm116 = vcmp.lt.s32.totalorder %v94, 4
    %v117 = vsel %vm113, %v97, %v100
    %v118 = vsel %vm116, %v106, 2102212464
    %v119 = vsel %vm115, %v103, %v118
    %v120 = vsel %vm114, %v117, %v119
    %v121 = vsel %vm113, %v100, %v103
    %v122 = vsel %vm116, %v109, 920167782
    %v123 = vsel %vm115, %v106, %v122
    %v124 = vsel %vm114, %v121, %v123
    %v125 = vsel %vm113, %v103, %v106
    %v126 = vsel %vm116, %v112, 1326507024
    %v127 = vsel %vm115, %v109, %v126
    %v128 = vsel %vm114, %v125, %v127
    %v129 = vshll.u32 %v89, 8
    %v130 = vand.u32 %v129, 65535
    %v131 = vshrl.u32 %v129, 16
    %v132 = vand.u32 %v128, 65535
    %v133 = vshrl.u32 %v128, 16
    %v134 = vmul.u32 %v130, %v132
    %v135 = vmul.u32 %v130, %v133
    %v136 = vmul.u32 %v131, %v132
    %v137 = vmul.u32 %v131, %v133
    %v138 = vshll.u32 %v135, 16
    %v139 = vshrl.u32 %v135, 16
    %v140 = vshll.u32 %v136, 16
    %v141 = vshrl.u32 %v136, 16
    %vm142 = vc.u32 %v134, %v138
    %v143 = vsel %vm142, 1, 0
    %v144 = vadd.s32 %v134, %v138
    %v145 = vadd.s32 %v137, %v143
    %vm146 = vc.u32 %v144, %v140
    %v147 = vsel %vm146, 1, 0
    %v148 = vadd.s32 %v144, %v140
    %v149 = vadd.s32 %v145, %v147
    %v150 = vadd.s32 %v149, %v139
    %v151 = vadd.s32 %v150, %v141
    %v152 = vand.u32 %v129, 65535
    %v153 = vshrl.u32 %v129, 16
    %v154 = vand.u32 %v124, 65535
    %v155 = vshrl.u32 %v124, 16
    %v156 = vmul.u32 %v152, %v154
    %v157 = vmul.u32 %v152, %v155
    %v158 = vmul.u32 %v153, %v154
    %v159 = vmul.u32 %v153, %v155
    %v160 = vshll.u32 %v157, 16
    %v161 = vshrl.u32 %v157, 16
    %v162 = vshll.u32 %v158, 16
    %v163 = vshrl.u32 %v158, 16
    %vm164 = vc.u32 %v156, %v160
    %v165 = vsel %vm164, 1, 0
    %v166 = vadd.s32 %v156, %v160
    %v167 = vadd.s32 %v159, %v165
    %vm168 = vc.u32 %v166, %v162
    %v169 = vsel %vm168, 1, 0
    %v170 = vadd.s32 %v166, %v162
    %v171 = vadd.s32 %v167, %v169
    %v172 = vadd.s32 %v171, %v161
    %v173 = vadd.s32 %v172, %v163
    %v174 = vmul.u32 %v129, %v120
    %v175 = vadd.s32 %v151, %v170
    %vm176 = vc.u32 %v151, %v170
    %v177 = vadd.s32 %v173, 1
    %v178 = vsel %vm176, %v177, %v173
    %v179 = vadd.s32 %v174, %v178
    %v180 = vadd.s32 %v179, 536870912
    %v181 = vshrl.u32 %v180, 30
    %v182 = vshll.u32 %v181, 30
    %v183 = vsub.s32 %v179, %v182
    %vm184 = vcmp.lt.s32.totalorder %v183, 0
    %v185 = vsub.s32 0, %v183
    %v186 = vsel %vm184, %v185, %v183
    %v187 = vclz %v186
    %v188 = vsub.s32 %v187, 2
    %vm189 = vcmp.gt.s32.totalorder 0, %v188
    %v190 = vsel %vm189, 0, %v188
    %v191 = vsub.s32 32, %v190
    %v192 = vshll.u32 %v183, %v190
    %v193 = vshrl.u32 %v175, %v191
    %v194 = vor.u32 %v192, %v193
    %v195 = vsub.s32 4294967266, %v190
    %v196 = vadd.s32 %v195, 127
    %v197 = vshll.u32 %v196, 23
    %v198 = vor.u32 4788187, %v197
    %v199 = vand.u32 2147483647, %v198
    %v201 = vcvt.s32.f32 %v194
    %v202 = vmul.f32 %v201, %v199
    %v203 = vxor.u32 %v202, 2147483648
    %v204 = vsel %vm83, %v203, %v202
    %v205 = vsub.s32 4, %v181
    %v206 = vsel %vm83, %v205, %v181
    %v207 = vsel %vm82, %v80, %v204
    %v208 = vsel %vm82, 0, %v206
    %v209 = vmul.f32 %v207, %v207
    %v210 = vmul.f32 %v209, -0.001358992
    %v211 = vadd.f32 %v210, 0.041655596
    %v212 = vmul.f32 %v209, %v211
    %v213 = vadd.f32 %v212, -0.4999988
    %v214 = vmul.f32 %v209, %v213
    %v215 = vadd.f32 1.0, %v214
    %v216 = vmul.f32 %v207, %v207
    %v217 = vmul.f32 %v216, -0.00019511016
    %v218 = vadd.f32 %v217, 0.008332121
    %v219 = vmul.f32 %v216, %v218
    %v220 = vadd.f32 %v219, -0.16666654
    %v221 = vmul.f32 %v216, %v220
    %v222 = vadd.f32 %v221, 1.0
    %v223 = vmul.f32 %v222, %v207
    %vm224 = vweird.f32 %v80
    %v225 = vadd.s32 %v208, 3
    %v226 = vand.u32 %v225, 3
    %vm227 = vcmp.lt.s32.totalorder %v226, 2
    %vm228 = vcmp.eq.s32.totalorder %v226, 0
    %v229 = vxor.u32 %v223, 2147483648
    %v230 = vsel %vm228, %v215, %v229
    %vm231 = vcmp.eq.s32.totalorder %v226, 2
    %v232 = vxor.u32 %v215, 2147483648
    %v233 = vsel %vm231, %v232, %v223
    %v234 = vsel %vm227, %v230, %v233
    %v235 = vsel %vm224, nan, %v234
    %236 = vst [vmem:[#allocation7] sm:$0x3] %v235
    // Predicated region
    $region22: #{tpu_custom_call.1} parent=1 // pred_check
      _
    $region23: #{tpu_custom_call.1} parent=1 // pred_check_branch
      %238 = sbr.rel (0) target = $region25
    $region24: #{tpu_custom_call.1} parent=1 // pred_region
      %240 = vsyncadd [#allocation4], 0
      %s242 = sshll.u32 [#allocation7], 4
      %s243 = int_to_ptr.vmem [resolvable:$true] %s242
      %s244 = sshll.u32 %s3, 4
      %s245 = int_to_ptr.hbm [resolvable:$true] %s244
      %247 = dma.vmem_to_hbm [thread:$0]  %s243, 32, %s245, [#allocation4]
    $region25: #{tpu_custom_call.1} parent=1 // pred_fallthru
      _
    // Predicated region
    $region26: #{tpu_custom_call.1} parent=1 // pred_check
      _
    $region27: #{tpu_custom_call.1} parent=1 // pred_check_branch
      %249 = sbr.rel (0) target = $region29
    $region28: #{tpu_custom_call.1} parent=1 // pred_region
      %251 = dma.done [#allocation4], 32
    $region29: #{tpu_custom_call.1} parent=1 // pred_fallthru
      _
    %252 = vsyncpa [#allocation3], 1
    %253 = vsyncpa [#allocation6], 1
    %254 = vsyncpa [#allocation4], 1

</llo_original>
